<compile_context>
chip_gen: v6e
topology: v6e:2x2x1
jax: 0.10.0
libtpu: 0.0.40
codegen_flags: <defaults>
</compile_context>

<pallas_src>
import functools

import jax
import jax.numpy as jnp
from jax.experimental import pallas as pl
from jax.experimental.pallas import tpu as pltpu

KH = KW = 3  # fixed 3x3 kernel, padding=1 ("same" conv)


def _conv3x3_relu_kernel(x_ref, w_ref, b_ref, o_ref, *, height, width):
    """3x3 'same' conv + bias + ReLU for one image, NCHW-native.

    x_ref: (1, Cin, H*W)        one NCHW image, spatial dims flattened
    w_ref: (KH*KW, Cout, Cin)   per-tap weight matrices, tap t = kh*KW + kw
    b_ref: (Cout, 1)            bias
    o_ref: (1, Cout, H*W)       NCHW output image, spatial dims flattened
    """
    cin = x_ref.shape[1]
    cout = o_ref.shape[1]
    hw = x_ref.shape[2]

    x = x_ref[0]  # (Cin, H*W)

    # Row / column index of every output position along the flat lane axis.
    lane = jax.lax.broadcasted_iota(jnp.int32, (cin, hw), 1)
    if (width & (width - 1)) == 0:  # power-of-two fast path: no vector int div
        row = lane >> (width.bit_length() - 1)
        col = lane & (width - 1)
    else:
        row = lane // width
        col = lane - row * width

    acc = jnp.zeros((cout, hw), jnp.float32)

    # TODO(synk): for non-toy H*W*Cin, loop over row bands with
    # lax.fori_loop(..., unroll=True) so only 3 input rows stay live per step.
    for kh in range(KH):
        dh = kh - 1
        for kw in range(KW):
            dw = kw - 1
            tap = kh * KW + kw
            s = dh * width + dw  # flat source offset: want out[p] = x[p + s]

            if s == 0:
                x_tap = x
            else:
                # jnp.roll convention: out[p] = in[p - shift]; use shift = -s.
                # XLU lane rotation; row/image wrap-around is masked out below.
                x_tap = pltpu.roll(x, shift=(-s) % hw, axis=1)

            # padding=1: zero out taps that would read outside the image.
            mask = None
            if dh == -1:
                mask = row >= 1
            elif dh == 1:
                mask = row <= height - 2
            if dw == -1:
                mcol = col >= 1
                mask = mcol if mask is None else (mask & mcol)
            elif dw == 1:
                mcol = col <= width - 2
                mask = mcol if mask is None else (mask & mcol)
            if mask is not None:
                x_tap = jnp.where(mask, x_tap, 0.0)

            # (Cout, Cin) @ (Cin, H*W) -> (Cout, H*W) on the MXU, f32 accumulate.
            acc = acc + jnp.dot(
                w_ref[tap], x_tap, preferred_element_type=jnp.float32
            )

    acc = acc + b_ref[...].astype(jnp.float32)  # (Cout, 1) broadcast over lanes
    acc = jnp.maximum(acc, 0.0)                 # ReLU
    o_ref[0] = acc.astype(o_ref.dtype)          # lane-dense (Cout, H*W) store


@jax.jit
def conv_layer_forward(x_nchw, weight_oihw, bias):
    """Forward pass of ConvolutionLayer: Conv2d(3x3, pad=1) + ReLU.

    x_nchw:      (N, Cin, H, W)      -- PyTorch layout
    weight_oihw: (Cout, Cin, 3, 3)   -- PyTorch Conv2d weight layout
    bias:        (Cout,)
    returns:     (N, Cout, H, W)
    """
    n, cin, h, w = x_nchw.shape
    cout = weight_oihw.shape[0]
    hw = h * w

    # Free row-major collapse (no transpose, no pad, no extra HBM pass).
    x_flat = x_nchw.reshape(n, cin, hw)

    # (Cout, Cin, KH, KW) -> (KH*KW, Cout, Cin); tiny (9*Cout*Cin elements).
    w_taps = jnp.transpose(weight_oihw, (2, 3, 0, 1)).reshape(KH * KW, cout, cin)
    b_col = bias.reshape(cout, 1)

    itemsize = jnp.dtype(x_nchw.dtype).itemsize
    cost = pl.CostEstimate(
        flops=2 * n * hw * cin * cout * KH * KW,
        transcendentals=0,
        bytes_accessed=(x_flat.size + n * cout * hw + w_taps.size + b_col.size)
        * itemsize,
    )

    kernel = functools.partial(_conv3x3_relu_kernel, height=h, width=w)

    # One image per grid step, marked "parallel" so both v7x TensorCores get
    # work when N >= 2; on v5e/v6e the extra ~0.35us/step is negligible.
    # TODO(synk): for N == 1 (or very large H*W*Cin), split the grid over row
    # bands with a 1-row halo so v7x still gets >=2 parallel steps and tiles
    # stay within its 64 MiB VMEM.
    out_flat = pl.pallas_call(
        kernel,
        out_shape=jax.ShapeDtypeStruct((n, cout, hw), x_nchw.dtype),
        grid_spec=pltpu.PrefetchScalarGridSpec(
            num_scalar_prefetch=0,
            grid=(n,),
            in_specs=[
                pl.BlockSpec((1, cin, hw), lambda i: (i, 0, 0)),
                pl.BlockSpec((KH * KW, cout, cin), lambda i: (0, 0, 0)),
                pl.BlockSpec((cout, 1), lambda i: (0, 0)),
            ],
            out_specs=pl.BlockSpec((1, cout, hw), lambda i: (i, 0, 0)),
        ),
        compiler_params=pltpu.CompilerParams(
            dimension_semantics=("parallel",),
        ),
        cost_estimate=cost,
    )(x_flat, w_taps, b_col)

    # Free split of the last dim: already NCHW.
    return out_flat.reshape(n, cout, h, w)


def _reference_forward(x_nchw, weight_oihw, bias):
    """Pure-JAX reference (lax conv) for correctness checking."""
    out = jax.lax.conv_general_dilated(
        x_nchw,
        weight_oihw,
        window_strides=(1, 1),
        padding=((1, 1), (1, 1)),
        dimension_numbers=("NCHW", "OIHW", "NCHW"),
        precision=jax.lax.Precision.HIGHEST,
    )
    out = out + bias.reshape(1, -1, 1, 1)
    return jnp.maximum(out, 0.0)


if __name__ == "__main__":
    # ConvolutionLayer(in_channels=4, out_channels=8), input (2, 4, 16, 16).
    N, CIN, H, W = 2, 4, 16, 16
    COUT = 8

    key = jax.random.PRNGKey(0)
    kx, kw_key, kb = jax.random.split(key, 3)

    x = jax.random.normal(kx, (N, CIN, H, W), dtype=jnp.float32)
    fan_in = CIN * KH * KW
    weight = jax.random.normal(
        kw_key, (COUT, CIN, KH, KW), dtype=jnp.float32
    ) / jnp.sqrt(jnp.float32(fan_in))
    bias = jax.random.normal(kb, (COUT,), dtype=jnp.float32) * 0.01

    out = conv_layer_forward(x, weight, bias)
    out = jax.block_until_ready(out)

    ref = _reference_forward(x, weight, bias)
    assert out.shape == (N, COUT, H, W)
    max_err = float(jnp.max(jnp.abs(out - ref)))
    # Tolerance covers MXU f32-matmul rounding differences vs the XLA reference
    # conv; structural bugs would show up as O(0.1..1) errors.
    assert max_err < 5e-3, f"mismatch vs reference conv: max abs err {max_err}"

    print("KERNEL_OK")
</pallas_src>

<mosaic_0001>
module attributes {stable_mosaic.version = 11 : i64} {
  func.func @_conv3x3_relu_kernel(%arg0: i32, %arg1: memref<1x4x256xf32, #tpu.memory_space<vmem>>, %arg2: memref<9x8x4xf32, #tpu.memory_space<vmem>>, %arg3: memref<8x1xf32, #tpu.memory_space<vmem>>, %arg4: memref<1x8x256xf32, #tpu.memory_space<vmem>>) attributes {dimension_semantics = [#tpu.dimension_semantics<parallel>], iteration_bounds = array<i64: 2>, scalar_prefetch = 0 : i64, scratch_operands = 0 : i64, tpu.core_type = #tpu.core_type<tc>, window_params = [{transform_indices = @transform_0, window_bounds = array<i64: 1, 4, 256>}, {pipeline_mode = #tpu.pipeline_mode<synchronous>, transform_indices = @transform_1, window_bounds = array<i64: 9, 8, 4>}, {pipeline_mode = #tpu.pipeline_mode<synchronous>, transform_indices = @transform_2, window_bounds = array<i64: 8, 1>}, {transform_indices = @transform_3, window_bounds = array<i64: 1, 8, 256>}]} {
    %c0 = arith.constant 0 : index
    %c0_0 = arith.constant 0 : index
    %c0_1 = arith.constant 0 : index
    %0 = vector.load %arg1[%c0, %c0_0, %c0_1] : memref<1x4x256xf32, #tpu.memory_space<vmem>>, vector<1x4x256xf32>
    %1 = vector.shape_cast %0 : vector<1x4x256xf32> to vector<4x256xf32>
    %2 = tpu.iota {dimensions = array<i32: 1>} : vector<4x256xi32>
    %c4_i32 = arith.constant 4 : i32
    %3 = vector.broadcast %c4_i32 : i32 to vector<4x256xi32>
    %4 = arith.shrsi %2, %3 : vector<4x256xi32>
    %c15_i32 = arith.constant 15 : i32
    %5 = vector.broadcast %c15_i32 : i32 to vector<4x256xi32>
    %6 = arith.andi %2, %5 : vector<4x256xi32>
    %cst = arith.constant 0.000000e+00 : f32
    %7 = vector.broadcast %cst : f32 to vector<8x256xf32>
    %c17_i32 = arith.constant 17 : i32
    %8 = tpu.dynamic_rotate %1 by %c17_i32 dim 1 : vector<4x256xf32>, i32 -> vector<4x256xf32>
    %c1_i32 = arith.constant 1 : i32
    %9 = vector.broadcast %c1_i32 : i32 to vector<4x256xi32>
    %10 = arith.cmpi sge, %4, %9 : vector<4x256xi32>
    %c1_i32_2 = arith.constant 1 : i32
    %11 = vector.broadcast %c1_i32_2 : i32 to vector<4x256xi32>
    %12 = arith.cmpi sge, %6, %11 : vector<4x256xi32>
    %13 = arith.andi %10, %12 : vector<4x256xi1>
    %cst_3 = arith.constant 0.000000e+00 : f32
    %14 = vector.broadcast %cst_3 : f32 to vector<4x256xf32>
    %15 = arith.select %13, %8, %14 : vector<4x256xi1>, vector<4x256xf32>
    %c0_4 = arith.constant 0 : index
    %c0_5 = arith.constant 0 : index
    %c0_6 = arith.constant 0 : index
    %16 = vector.load %arg2[%c0_4, %c0_5, %c0_6] : memref<9x8x4xf32, #tpu.memory_space<vmem>>, vector<1x8x4xf32>
    %17 = vector.shape_cast %16 : vector<1x8x4xf32> to vector<8x4xf32>
    %cst_7 = arith.constant dense<0.000000e+00> : vector<8x256xf32>
    %18 = tpu.matmul %17, %15, %cst_7 {dimension_numbers = #tpu.dot_dimension_numbers<[1], [0], [0], [1], [0, 0, 1, 1], [], []>} : vector<8x4xf32>, vector<4x256xf32>, vector<8x256xf32> -> vector<8x256xf32>
    %19 = arith.addf %7, %18 : vector<8x256xf32>
    %c16_i32 = arith.constant 16 : i32
    %20 = tpu.dynamic_rotate %1 by %c16_i32 dim 1 : vector<4x256xf32>, i32 -> vector<4x256xf32>
    %c1_i32_8 = arith.constant 1 : i32
    %21 = vector.broadcast %c1_i32_8 : i32 to vector<4x256xi32>
    %22 = arith.cmpi sge, %4, %21 : vector<4x256xi32>
    %cst_9 = arith.constant 0.000000e+00 : f32
    %23 = vector.broadcast %cst_9 : f32 to vector<4x256xf32>
    %24 = arith.select %22, %20, %23 : vector<4x256xi1>, vector<4x256xf32>
    %c1 = arith.constant 1 : index
    %c0_10 = arith.constant 0 : index
    %c0_11 = arith.constant 0 : index
    %25 = vector.load %arg2[%c1, %c0_10, %c0_11] : memref<9x8x4xf32, #tpu.memory_space<vmem>>, vector<1x8x4xf32>
    %26 = vector.shape_cast %25 : vector<1x8x4xf32> to vector<8x4xf32>
    %cst_12 = arith.constant dense<0.000000e+00> : vector<8x256xf32>
    %27 = tpu.matmul %26, %24, %cst_12 {dimension_numbers = #tpu.dot_dimension_numbers<[1], [0], [0], [1], [0, 0, 1, 1], [], []>} : vector<8x4xf32>, vector<4x256xf32>, vector<8x256xf32> -> vector<8x256xf32>
    %28 = arith.addf %19, %27 : vector<8x256xf32>
    %c15_i32_13 = arith.constant 15 : i32
    %29 = tpu.dynamic_rotate %1 by %c15_i32_13 dim 1 : vector<4x256xf32>, i32 -> vector<4x256xf32>
    %c1_i32_14 = arith.constant 1 : i32
    %30 = vector.broadcast %c1_i32_14 : i32 to vector<4x256xi32>
    %31 = arith.cmpi sge, %4, %30 : vector<4x256xi32>
    %c14_i32 = arith.constant 14 : i32
    %32 = vector.broadcast %c14_i32 : i32 to vector<4x256xi32>
    %33 = arith.cmpi sle, %6, %32 : vector<4x256xi32>
    %34 = arith.andi %31, %33 : vector<4x256xi1>
    %cst_15 = arith.constant 0.000000e+00 : f32
    %35 = vector.broadcast %cst_15 : f32 to vector<4x256xf32>
    %36 = arith.select %34, %29, %35 : vector<4x256xi1>, vector<4x256xf32>
    %c2 = arith.constant 2 : index
    %c0_16 = arith.constant 0 : index
    %c0_17 = arith.constant 0 : index
    %37 = vector.load %arg2[%c2, %c0_16, %c0_17] : memref<9x8x4xf32, #tpu.memory_space<vmem>>, vector<1x8x4xf32>
    %38 = vector.shape_cast %37 : vector<1x8x4xf32> to vector<8x4xf32>
    %cst_18 = arith.constant dense<0.000000e+00> : vector<8x256xf32>
    %39 = tpu.matmul %38, %36, %cst_18 {dimension_numbers = #tpu.dot_dimension_numbers<[1], [0], [0], [1], [0, 0, 1, 1], [], []>} : vector<8x4xf32>, vector<4x256xf32>, vector<8x256xf32> -> vector<8x256xf32>
    %40 = arith.addf %28, %39 : vector<8x256xf32>
    %c1_i32_19 = arith.constant 1 : i32
    %41 = tpu.dynamic_rotate %1 by %c1_i32_19 dim 1 : vector<4x256xf32>, i32 -> vector<4x256xf32>
    %c1_i32_20 = arith.constant 1 : i32
    %42 = vector.broadcast %c1_i32_20 : i32 to vector<4x256xi32>
    %43 = arith.cmpi sge, %6, %42 : vector<4x256xi32>
    %cst_21 = arith.constant 0.000000e+00 : f32
    %44 = vector.broadcast %cst_21 : f32 to vector<4x256xf32>
    %45 = arith.select %43, %41, %44 : vector<4x256xi1>, vector<4x256xf32>
    %c3 = arith.constant 3 : index
    %c0_22 = arith.constant 0 : index
    %c0_23 = arith.constant 0 : index
    %46 = vector.load %arg2[%c3, %c0_22, %c0_23] : memref<9x8x4xf32, #tpu.memory_space<vmem>>, vector<1x8x4xf32>
    %47 = vector.shape_cast %46 : vector<1x8x4xf32> to vector<8x4xf32>
    %cst_24 = arith.constant dense<0.000000e+00> : vector<8x256xf32>
    %48 = tpu.matmul %47, %45, %cst_24 {dimension_numbers = #tpu.dot_dimension_numbers<[1], [0], [0], [1], [0, 0, 1, 1], [], []>} : vector<8x4xf32>, vector<4x256xf32>, vector<8x256xf32> -> vector<8x256xf32>
    %49 = arith.addf %40, %48 : vector<8x256xf32>
    %c4 = arith.constant 4 : index
    %c0_25 = arith.constant 0 : index
    %c0_26 = arith.constant 0 : index
    %50 = vector.load %arg2[%c4, %c0_25, %c0_26] : memref<9x8x4xf32, #tpu.memory_space<vmem>>, vector<1x8x4xf32>
    %51 = vector.shape_cast %50 : vector<1x8x4xf32> to vector<8x4xf32>
    %cst_27 = arith.constant dense<0.000000e+00> : vector<8x256xf32>
    %52 = tpu.matmul %51, %1, %cst_27 {dimension_numbers = #tpu.dot_dimension_numbers<[1], [0], [0], [1], [0, 0, 1, 1], [], []>} : vector<8x4xf32>, vector<4x256xf32>, vector<8x256xf32> -> vector<8x256xf32>
    %53 = arith.addf %49, %52 : vector<8x256xf32>
    %c255_i32 = arith.constant 255 : i32
    %54 = tpu.dynamic_rotate %1 by %c255_i32 dim 1 : vector<4x256xf32>, i32 -> vector<4x256xf32>
    %c14_i32_28 = arith.constant 14 : i32
    %55 = vector.broadcast %c14_i32_28 : i32 to vector<4x256xi32>
    %56 = arith.cmpi sle, %6, %55 : vector<4x256xi32>
    %cst_29 = arith.constant 0.000000e+00 : f32
    %57 = vector.broadcast %cst_29 : f32 to vector<4x256xf32>
    %58 = arith.select %56, %54, %57 : vector<4x256xi1>, vector<4x256xf32>
    %c5 = arith.constant 5 : index
    %c0_30 = arith.constant 0 : index
    %c0_31 = arith.constant 0 : index
    %59 = vector.load %arg2[%c5, %c0_30, %c0_31] : memref<9x8x4xf32, #tpu.memory_space<vmem>>, vector<1x8x4xf32>
    %60 = vector.shape_cast %59 : vector<1x8x4xf32> to vector<8x4xf32>
    %cst_32 = arith.constant dense<0.000000e+00> : vector<8x256xf32>
    %61 = tpu.matmul %60, %58, %cst_32 {dimension_numbers = #tpu.dot_dimension_numbers<[1], [0], [0], [1], [0, 0, 1, 1], [], []>} : vector<8x4xf32>, vector<4x256xf32>, vector<8x256xf32> -> vector<8x256xf32>
    %62 = arith.addf %53, %61 : vector<8x256xf32>
    %c241_i32 = arith.constant 241 : i32
    %63 = tpu.dynamic_rotate %1 by %c241_i32 dim 1 : vector<4x256xf32>, i32 -> vector<4x256xf32>
    %c14_i32_33 = arith.constant 14 : i32
    %64 = vector.broadcast %c14_i32_33 : i32 to vector<4x256xi32>
    %65 = arith.cmpi sle, %4, %64 : vector<4x256xi32>
    %c1_i32_34 = arith.constant 1 : i32
    %66 = vector.broadcast %c1_i32_34 : i32 to vector<4x256xi32>
    %67 = arith.cmpi sge, %6, %66 : vector<4x256xi32>
    %68 = arith.andi %65, %67 : vector<4x256xi1>
    %cst_35 = arith.constant 0.000000e+00 : f32
    %69 = vector.broadcast %cst_35 : f32 to vector<4x256xf32>
    %70 = arith.select %68, %63, %69 : vector<4x256xi1>, vector<4x256xf32>
    %c6 = arith.constant 6 : index
    %c0_36 = arith.constant 0 : index
    %c0_37 = arith.constant 0 : index
    %71 = vector.load %arg2[%c6, %c0_36, %c0_37] : memref<9x8x4xf32, #tpu.memory_space<vmem>>, vector<1x8x4xf32>
    %72 = vector.shape_cast %71 : vector<1x8x4xf32> to vector<8x4xf32>
    %cst_38 = arith.constant dense<0.000000e+00> : vector<8x256xf32>
    %73 = tpu.matmul %72, %70, %cst_38 {dimension_numbers = #tpu.dot_dimension_numbers<[1], [0], [0], [1], [0, 0, 1, 1], [], []>} : vector<8x4xf32>, vector<4x256xf32>, vector<8x256xf32> -> vector<8x256xf32>
    %74 = arith.addf %62, %73 : vector<8x256xf32>
    %c240_i32 = arith.constant 240 : i32
    %75 = tpu.dynamic_rotate %1 by %c240_i32 dim 1 : vector<4x256xf32>, i32 -> vector<4x256xf32>
    %c14_i32_39 = arith.constant 14 : i32
    %76 = vector.broadcast %c14_i32_39 : i32 to vector<4x256xi32>
    %77 = arith.cmpi sle, %4, %76 : vector<4x256xi32>
    %cst_40 = arith.constant 0.000000e+00 : f32
    %78 = vector.broadcast %cst_40 : f32 to vector<4x256xf32>
    %79 = arith.select %77, %75, %78 : vector<4x256xi1>, vector<4x256xf32>
    %c7 = arith.constant 7 : index
    %c0_41 = arith.constant 0 : index
    %c0_42 = arith.constant 0 : index
    %80 = vector.load %arg2[%c7, %c0_41, %c0_42] : memref<9x8x4xf32, #tpu.memory_space<vmem>>, vector<1x8x4xf32>
    %81 = vector.shape_cast %80 : vector<1x8x4xf32> to vector<8x4xf32>
    %cst_43 = arith.constant dense<0.000000e+00> : vector<8x256xf32>
    %82 = tpu.matmul %81, %79, %cst_43 {dimension_numbers = #tpu.dot_dimension_numbers<[1], [0], [0], [1], [0, 0, 1, 1], [], []>} : vector<8x4xf32>, vector<4x256xf32>, vector<8x256xf32> -> vector<8x256xf32>
    %83 = arith.addf %74, %82 : vector<8x256xf32>
    %c239_i32 = arith.constant 239 : i32
    %84 = tpu.dynamic_rotate %1 by %c239_i32 dim 1 : vector<4x256xf32>, i32 -> vector<4x256xf32>
    %c14_i32_44 = arith.constant 14 : i32
    %85 = vector.broadcast %c14_i32_44 : i32 to vector<4x256xi32>
    %86 = arith.cmpi sle, %4, %85 : vector<4x256xi32>
    %c14_i32_45 = arith.constant 14 : i32
    %87 = vector.broadcast %c14_i32_45 : i32 to vector<4x256xi32>
    %88 = arith.cmpi sle, %6, %87 : vector<4x256xi32>
    %89 = arith.andi %86, %88 : vector<4x256xi1>
    %cst_46 = arith.constant 0.000000e+00 : f32
    %90 = vector.broadcast %cst_46 : f32 to vector<4x256xf32>
    %91 = arith.select %89, %84, %90 : vector<4x256xi1>, vector<4x256xf32>
    %c8 = arith.constant 8 : index
    %c0_47 = arith.constant 0 : index
    %c0_48 = arith.constant 0 : index
    %92 = vector.load %arg2[%c8, %c0_47, %c0_48] : memref<9x8x4xf32, #tpu.memory_space<vmem>>, vector<1x8x4xf32>
    %93 = vector.shape_cast %92 : vector<1x8x4xf32> to vector<8x4xf32>
    %cst_49 = arith.constant dense<0.000000e+00> : vector<8x256xf32>
    %94 = tpu.matmul %93, %91, %cst_49 {dimension_numbers = #tpu.dot_dimension_numbers<[1], [0], [0], [1], [0, 0, 1, 1], [], []>} : vector<8x4xf32>, vector<4x256xf32>, vector<8x256xf32> -> vector<8x256xf32>
    %95 = arith.addf %83, %94 : vector<8x256xf32>
    %c0_50 = arith.constant 0 : index
    %c0_51 = arith.constant 0 : index
    %96 = vector.load %arg3[%c0_50, %c0_51] : memref<8x1xf32, #tpu.memory_space<vmem>>, vector<8x1xf32>
    %97 = vector.broadcast %96 : vector<8x1xf32> to vector<8x256xf32>
    %98 = arith.addf %95, %97 : vector<8x256xf32>
    %cst_52 = arith.constant 0.000000e+00 : f32
    %99 = vector.broadcast %cst_52 : f32 to vector<8x256xf32>
    %100 = arith.maximumf %98, %99 : vector<8x256xf32>
    %c0_53 = arith.constant 0 : index
    %c0_54 = arith.constant 0 : index
    %c0_55 = arith.constant 0 : index
    %101 = vector.load %arg4[%c0_53, %c0_54, %c0_55] : memref<1x8x256xf32, #tpu.memory_space<vmem>>, vector<1x8x256xf32>
    %102 = vector.shape_cast %101 : vector<1x8x256xf32> to vector<8x256xf32>
    %103 = vector.shape_cast %100 : vector<8x256xf32> to vector<1x8x256xf32>
    tpu.vector_store %arg4[%c0_53, %c0_54, %c0_55], %103 {strides = array<i32>} : memref<1x8x256xf32, #tpu.memory_space<vmem>>, vector<1x8x256xf32>,
    return
  }
  func.func @transform_0(%arg0: i32) -> (i32, i32, i32) {
    %c0_i32 = arith.constant 0 : i32
    %c0_i32_0 = arith.constant 0 : i32
    %c0_i32_1 = arith.constant 0 : i32
    return %arg0, %c0_i32, %c0_i32_0 : i32, i32, i32
  }
  func.func @transform_1(%arg0: i32) -> (i32, i32, i32) {
    %c0_i32 = arith.constant 0 : i32
    %c0_i32_0 = arith.constant 0 : i32
    %c0_i32_1 = arith.constant 0 : i32
    %c0_i32_2 = arith.constant 0 : i32
    return %c0_i32, %c0_i32_0, %c0_i32_1 : i32, i32, i32
  }
  func.func @transform_2(%arg0: i32) -> (i32, i32) {
    %c0_i32 = arith.constant 0 : i32
    %c0_i32_0 = arith.constant 0 : i32
    %c0_i32_1 = arith.constant 0 : i32
    return %c0_i32, %c0_i32_0 : i32, i32
  }
  func.func @transform_3(%arg0: i32) -> (i32, i32, i32) {
    %c0_i32 = arith.constant 0 : i32
    %c0_i32_0 = arith.constant 0 : i32
    %c0_i32_1 = arith.constant 0 : i32
    return %arg0, %c0_i32, %c0_i32_0 : i32, i32, i32
  }
}

</mosaic_0001>

<llo_original>
// kernel: conv_layer_forward.1
$region0: #{conv_layer_forward.1}
  #allocation0 [shape = 'u32[]', space=smem, size = 0x4, offset = 0x4, fixed_abs, tag = 'smem constant byte address 0x4 - core index']
  #allocation1 [shape = 'u32[144,128]{1,0:T(1,128)}', space=vmem, size = 0x12000, scoped, tag = 'internal scratch']
  %s0 = inlined_call_operand.vmem [shape: f32[2,4,256], index: 0, kind: input, shape index: {}]
  %s1 = inlined_call_operand.vmem [shape: f32[9,8,4], index: 1, kind: input, shape index: {}]
  %s2 = inlined_call_operand.vmem [shape: f32[8,1], index: 2, kind: input, shape index: {}]
  %s3 = inlined_call_operand.vmem [shape: f32[2,8,256], index: 3, kind: output, shape index: {}]
  %s4 = sld [smem:[#allocation0]]
  $region45: #{conv_layer_forward.1} parent=0
    _
  %s6 = ssub.s32 1, %s4
  %s7 = scalar_select 0, %s6, %s4
  loop: start=0, step=1, limit=4
  $region2: #{conv_layer_forward.1} parent=0 // loop_pre_header
    _
  $region3: #{conv_layer_forward.1} parent=0 // loop_header
    %s9 = sphi 0, %s13
    %p10 = scmp.ge.s32.totalorder %s9, 4
    %s19 = sphi 0, %s21
    %s22 = sphi 0, %s19
    %s23 = sphi 0, %s22
    %s39 = sphi 0, %s23
    %s43 = sphi 0, %s43
    %s45 = sphi 0, %s43
    %s46 = sphi 0, %s45
    %s60 = sphi 0, %s46
    %s64 = sphi 0, %s64
    %s66 = sphi 0, %s64
    %s67 = sphi 0, %s66
    %s81 = sphi 0, %s67
    %s87 = sphi 0, %s89
    %s90 = sphi 0, %s87
    %s91 = sphi 0, %s90
    %s107 = sphi 0, %s91
  $region4: #{conv_layer_forward.1} parent=0 // loop_header_branch
    %12 = sbr.rel (%p10) target = $region8
  $region5: #{conv_layer_forward.1} parent=0 // loop_body
    %s14 = ssub.s32 %s9, 1
    %s15 = ssub.s32 %s9, 2
    %s16 = sadd.s32 %s9, 1
    %s17 = ssub.s32 %s9, %s16
    %p18 = scmp.eq.s32.totalorder %s17, 0
    %s20 = sadd.s32 %s19, 1
    %s21 = scalar_select %p18, %s19, %s20
    %p24 = pneg %p18
    %p25 = scmp.eq.s32.totalorder %s9, 1
    %p26 = por %p24, %p25
    %p27 = scmp.ne.s32.totalorder %s19, %s22
    %p28 = scmp.eq.s32.totalorder %s9, 0
    %p29 = por %p27, %p28
    %p30 = scmp.ne.s32.totalorder %s19, %s22
    %p31 = scmp.eq.s32.totalorder %s14, 1
    %p32 = por %p30, %p31
    %p33 = scmp.ne.s32.totalorder %s22, %s23
    %p34 = scmp.eq.s32.totalorder %s14, 0
    %p35 = por %p33, %p34
    %p36 = scmp.ne.s32.totalorder %s22, %s23
    %p37 = scmp.eq.s32.totalorder %s15, 1
    %p38 = por %p36, %p37
    %p40 = scmp.ne.s32.totalorder %s23, %s39
    %p41 = scmp.eq.s32.totalorder %s15, 0
    %p42 = por %p40, %p41
    %s44 = sadd.s32 %s43, 1
    %p47 = scmp.eq.s32.totalorder %s9, 1
    %p48 = scmp.ne.s32.totalorder %s43, %s45
    %p49 = scmp.eq.s32.totalorder %s9, 0
    %p50 = por %p48, %p49
    %p51 = scmp.ne.s32.totalorder %s43, %s45
    %p52 = scmp.eq.s32.totalorder %s14, 1
    %p53 = por %p51, %p52
    %p54 = scmp.ne.s32.totalorder %s45, %s46
    %p55 = scmp.eq.s32.totalorder %s14, 0
    %p56 = por %p54, %p55
    %p57 = scmp.ne.s32.totalorder %s45, %s46
    %p58 = scmp.eq.s32.totalorder %s15, 1
    %p59 = por %p57, %p58
    %p61 = scmp.ne.s32.totalorder %s46, %s60
    %p62 = scmp.eq.s32.totalorder %s15, 0
    %p63 = por %p61, %p62
    %s65 = sadd.s32 %s64, 1
    %p68 = scmp.eq.s32.totalorder %s9, 1
    %p69 = scmp.ne.s32.totalorder %s64, %s66
    %p70 = scmp.eq.s32.totalorder %s9, 0
    %p71 = por %p69, %p70
    %p72 = scmp.ne.s32.totalorder %s64, %s66
    %p73 = scmp.eq.s32.totalorder %s14, 1
    %p74 = por %p72, %p73
    %p75 = scmp.ne.s32.totalorder %s66, %s67
    %p76 = scmp.eq.s32.totalorder %s14, 0
    %p77 = por %p75, %p76
    %p78 = scmp.ne.s32.totalorder %s66, %s67
    %p79 = scmp.eq.s32.totalorder %s15, 1
    %p80 = por %p78, %p79
    %p82 = scmp.ne.s32.totalorder %s67, %s81
    %p83 = scmp.eq.s32.totalorder %s15, 0
    %p84 = por %p82, %p83
    %s85 = ssub.s32 %s9, %s16
    %p86 = scmp.eq.s32.totalorder %s85, 0
    %s88 = sadd.s32 %s87, 1
    %s89 = scalar_select %p86, %s87, %s88
    %p92 = pneg %p86
    %p93 = scmp.eq.s32.totalorder %s9, 1
    %p94 = por %p92, %p93
    %p95 = scmp.ne.s32.totalorder %s87, %s90
    %p96 = scmp.eq.s32.totalorder %s9, 0
    %p97 = por %p95, %p96
    %p98 = scmp.ne.s32.totalorder %s87, %s90
    %p99 = scmp.eq.s32.totalorder %s14, 1
    %p100 = por %p98, %p99
    %p101 = scmp.ne.s32.totalorder %s90, %s91
    %p102 = scmp.eq.s32.totalorder %s14, 0
    %p103 = por %p101, %p102
    %p104 = scmp.ne.s32.totalorder %s90, %s91
    %p105 = scmp.eq.s32.totalorder %s15, 1
    %p106 = por %p104, %p105
    %p108 = scmp.ne.s32.totalorder %s91, %s107
    %p109 = scmp.eq.s32.totalorder %s15, 0
    %p110 = por %p108, %p109
    %p111 = scmp.le.s32.totalorder 1, %s9
    %p112 = scmp.lt.s32.totalorder %s9, 3
    %p113 = pnand %p111, %p112
    %p114 = pneg %p113
    // Predicated region
    $region9: #{conv_layer_forward.1} parent=5 // pred_check
      _
    $region10: #{conv_layer_forward.1} parent=5 // pred_check_branch
      %116 = sbr.rel (%p113) target = $region12
    $region11: #{conv_layer_forward.1} parent=5 // pred_region
      %s117 = ssub.s32 %s9, 1
      // Predicated region
      $region13: #{conv_layer_forward.1} parent=11 // pred_check
        %p118 = pneg %p56
      $region14: #{conv_layer_forward.1} parent=11 // pred_check_branch
        %120 = sbr.rel (%p118) target = $region16
      $region15: #{conv_layer_forward.1} parent=11 // pred_region
        _
      $region16: #{conv_layer_forward.1} parent=11 // pred_fallthru
        _
      // Predicated region
      $region17: #{conv_layer_forward.1} parent=11 // pred_check
        %p121 = pneg %p77
      $region18: #{conv_layer_forward.1} parent=11 // pred_check_branch
        %123 = sbr.rel (%p121) target = $region20
      $region19: #{conv_layer_forward.1} parent=11 // pred_region
        _
      $region20: #{conv_layer_forward.1} parent=11 // pred_fallthru
        _
    $region12: #{conv_layer_forward.1} parent=5 // pred_fallthru
      _
    %p124 = scmp.lt.s32.totalorder %s9, 2
    // Predicated region
    $region21: #{conv_layer_forward.1} parent=5 // pred_check
      %p125 = pneg %p124
    $region22: #{conv_layer_forward.1} parent=5 // pred_check_branch
      %127 = sbr.rel (%p125) target = $region24
    $region23: #{conv_layer_forward.1} parent=5 // pred_region
      // Predicated region
      $region25: #{conv_layer_forward.1} parent=23 // pred_check
        %p128 = pneg %p29
      $region26: #{conv_layer_forward.1} parent=23 // pred_check_branch
        %130 = sbr.rel (%p128) target = $region28
      $region27: #{conv_layer_forward.1} parent=23 // pred_region
        %p131 = scmp.lt.s32.totalorder %s9, 1
        %s132 = scalar_select %p131, %s9, 1
        %s133 = smul.addr %s132, 2
        %s134 = smul.addr %s133, 4
        %s135 = scalar_lea.vmem %s0, %s134
      $region28: #{conv_layer_forward.1} parent=23 // pred_fallthru
        _
    $region24: #{conv_layer_forward.1} parent=5 // pred_fallthru
      _
    %p136 = scmp.le.s32.totalorder 1, %s9
    %p137 = scmp.lt.s32.totalorder %s9, 3
    %p138 = pnand %p136, %p137
    %p139 = pneg %p138
    // Predicated region
    $region29: #{conv_layer_forward.1} parent=5 // pred_check
      _
    $region30: #{conv_layer_forward.1} parent=5 // pred_check_branch
      %141 = sbr.rel (%p138) target = $region32
    $region31: #{conv_layer_forward.1} parent=5 // pred_region
      %s142 = ssub.s32 %s9, 1
      %p143 = scmp.lt.s32.totalorder %s14, 1
      %s144 = scalar_select %p143, %s14, 1
      %s145 = smul.addr %s144, 2
      %s146 = smul.addr %s145, 4
      %s147 = scalar_lea.vmem %s0, %s146
      %p148 = pneg %p35
      %p149 = pneg %p32
      %p150 = pneg %p56
      %p151 = pneg %p53
      %p152 = pneg %p77
      %p153 = pneg %p74
      %p154 = pneg %p103
      %p155 = pneg %p100
      %p156 = scmp.lt.s32.totalorder %s14, 1
      %s157 = scalar_select %p156, %s14, 1
      %s158 = smul.addr %s157, 2
      %s159 = smul.addr %s158, 8
      %s160 = scalar_lea.vmem %s3, %s159
      %p161 = scmp.lt.s32.totalorder %s14, 1
      %s162 = scalar_select %p161, %s14, 1
      %s163 = smul.addr %s162, 2
      %s164 = smul.addr %s163, 4
      %s165 = scalar_lea.vmem %s0, %s164
      %p166 = scmp.lt.s32.totalorder %s14, 1
      %s167 = scalar_select %p166, %s14, 1
      %s168 = smul.addr %s167, 2
      %s169 = smul.addr %s168, 8
      %s170 = scalar_lea.vmem %s3, %s169
      %v171 = vld [vmem:[%s165] sm:$0xff]
      %v172 = vlaneseq
      %v173 = vand.u32 %v172, 127
      %v174 = vadd.s32 %v173, 128
      %v175 = vshra.s32 %v173, 4
      %v176 = vshra.s32 %v174, 4
      %v177 = vand.u32 %v173, 15
      %v178 = vand.u32 %v174, 15
      %v180 = vcombine.high %v171, %v171
      %182 = vrot.lane.b32.xlu0 %v171, 17
      %v183 = vpop.permute.xlu0 %182
      %184 = vrot.lane.b32.xlu0 %v180, 17
      %v185 = vpop.permute.xlu0 %184
      %vm186 = vcmp.lt.s32.totalorder %v173, 17
      %v187 = vsel %vm186, %v183, %v185
      %v188 = vsel %vm186, %v185, %v183
      %vm189 = vcmp.ge.s32.totalorder %v175, 1
      %vm190 = vcmp.ge.s32.totalorder %v176, 1
      %vm191 = vcmp.ge.s32.totalorder %v177, 1
      %vm192 = vcmp.ge.s32.totalorder %v178, 1
      %vm193 = vmand %vm189, %vm191
      %vm194 = vmand %vm190, %vm192
      %v195 = vsel %vm193, %v188, 0.0
      %v196 = vsel %vm194, %v187, 0.0
      %v197 = vld [vmem:[%s1] sm:$0xff]
      %198 = vrot.lane.b32.xlu0 %v171, 16
      %v199 = vpop.permute.xlu0 %198
      %200 = vrot.lane.b32.xlu0 %v180, 16
      %v201 = vpop.permute.xlu0 %200
      %vm202 = vcmp.lt.s32.totalorder %v173, 16
      %v203 = vsel %vm202, %v199, %v201
      %v204 = vsel %vm202, %v201, %v199
      %v205 = vsel %vm189, %v204, 0.0
      %v206 = vsel %vm190, %v203, 0.0
      %s207 = scalar_lea.vmem %s1, 8
      %v208 = vld [vmem:[%s207] sm:$0xff]
      %vm209 = vcmask 31744
      %v211 = vsel %vm209, %v208, 0
      %vm213 = vcmask 1043456
      %v215 = vsel %vm213, %v205, 0
      %v218 = vsel %vm213, %v206, 0
      %220 = vmatprep.subr.mxu0 0.0
      %221 = vmatpush1.msra.mxu0 0.0
      %222 = vmatprep.subr.mxu0 0.0
      %223 = vmatpush1.msra.mxu0 0.0
      %224 = vmatprep.subr.mxu0 0.0
      %225 = vmatpush1.msra.mxu0 0.0
      %226 = vmatprep.subr.mxu0 0.0
      %227 = vmatpush1.msra.mxu0 0.0
      %228 = vmatprep.subr.mxu0 0.0
      %229 = vmatpush1.msra.mxu0 0.0
      %230 = vmatprep.subr.mxu0 0.0
      %231 = vmatpush1.msra.mxu0 0.0
      %232 = vmatprep.subr.mxu0 0.0
      %233 = vmatpush1.msra.mxu0 0.0
      %234 = vmatprep.subr.mxu0 0.0
      %235 = vmatpush1.msra.mxu0 0.0
      %236 = vmatprep.subr.mxu0 0.0
      %237 = vmatpush1.msra.mxu0 0.0
      %238 = vmatprep.subr.mxu0 0.0
      %239 = vmatpush1.msra.mxu0 0.0
      %240 = vmatprep.subr.mxu0 0.0
      %241 = vmatpush1.msra.mxu0 0.0
      %242 = vmatprep.subr.mxu0 0.0
      %243 = vmatpush1.msra.mxu0 0.0
      %244 = vmatprep.subr.mxu0 0.0
      %245 = vmatpush1.msra.mxu0 0.0
      %246 = vmatprep.subr.mxu0 0.0
      %247 = vmatpush1.msra.mxu0 0.0
      %248 = vmatprep.subr.mxu0 0.0
      %249 = vmatpush1.msra.mxu0 0.0
      %250 = vmatprep.subr.mxu0 %v218
      %251 = vmatpush1.msra.mxu0 %v215
      %252 = vmatprep.subr.mxu0 0.0
      %253 = vmatpush2.msra.mxu0 0.0
      %254 = vmatprep.subr.mxu0 0.0
      %255 = vmatpush2.msra.mxu0 0.0
      %256 = vmatprep.subr.mxu0 0.0
      %257 = vmatpush2.msra.mxu0 0.0
      %258 = vmatprep.subr.mxu0 0.0
      %259 = vmatpush2.msra.mxu0 0.0
      %260 = vmatprep.subr.mxu0 0.0
      %261 = vmatpush2.msra.mxu0 0.0
      %262 = vmatprep.subr.mxu0 0.0
      %263 = vmatpush2.msra.mxu0 0.0
      %264 = vmatprep.subr.mxu0 0.0
      %265 = vmatpush2.msra.mxu0 0.0
      %266 = vmatprep.subr.mxu0 0.0
      %267 = vmatpush2.msra.mxu0 0.0
      %268 = vmatprep.subr.mxu0 0.0
      %269 = vmatpush2.msra.mxu0 0.0
      %270 = vmatprep.subr.mxu0 0.0
      %271 = vmatpush2.msra.mxu0 0.0
      %272 = vmatprep.subr.mxu0 0.0
      %273 = vmatpush2.msra.mxu0 0.0
      %274 = vmatprep.subr.mxu0 0.0
      %275 = vmatpush2.msra.mxu0 0.0
      %276 = vmatprep.subr.mxu0 0.0
      %277 = vmatpush2.msra.mxu0 0.0
      %278 = vmatprep.subr.mxu0 0.0
      %279 = vmatpush2.msra.mxu0 0.0
      %280 = vmatprep.subr.mxu0 0.0
      %281 = vmatpush2.msra.mxu0 0.0
      %282 = vmatprep.subr.mxu0 0.0
      %283 = vmatpush2.msra.mxu0 0.0
      %284 = vmatprep.mubr.f32.mxu0 0.0
      %285 = vmatmul.mubr.f32.gmra.mxu0 %v211
      %v286 = vpop.f32.mrf.mxu0
      %v287 = vadd.f32 0.0, %v286
      %v288 = vpop.f32.mrf.mxu0
      %v289 = vadd.f32 0.0, %v288
      %290 = vdwg.mxu0
      %v292 = vsel %vm209, %v197, 0
      %v295 = vsel %vm213, %v195, 0
      %v298 = vsel %vm213, %v196, 0
      %300 = vmatprep.subr.mxu0 0.0
      %301 = vmatpush1.msra.mxu0 0.0
      %302 = vmatprep.subr.mxu0 0.0
      %303 = vmatpush1.msra.mxu0 0.0
      %304 = vmatprep.subr.mxu0 0.0
      %305 = vmatpush1.msra.mxu0 0.0
      %306 = vmatprep.subr.mxu0 0.0
      %307 = vmatpush1.msra.mxu0 0.0
      %308 = vmatprep.subr.mxu0 0.0
      %309 = vmatpush1.msra.mxu0 0.0
      %310 = vmatprep.subr.mxu0 0.0
      %311 = vmatpush1.msra.mxu0 0.0
      %312 = vmatprep.subr.mxu0 0.0
      %313 = vmatpush1.msra.mxu0 0.0
      %314 = vmatprep.subr.mxu0 0.0
      %315 = vmatpush1.msra.mxu0 0.0
      %316 = vmatprep.subr.mxu0 0.0
      %317 = vmatpush1.msra.mxu0 0.0
      %318 = vmatprep.subr.mxu0 0.0
      %319 = vmatpush1.msra.mxu0 0.0
      %320 = vmatprep.subr.mxu0 0.0
      %321 = vmatpush1.msra.mxu0 0.0
      %322 = vmatprep.subr.mxu0 0.0
      %323 = vmatpush1.msra.mxu0 0.0
      %324 = vmatprep.subr.mxu0 0.0
      %325 = vmatpush1.msra.mxu0 0.0
      %326 = vmatprep.subr.mxu0 0.0
      %327 = vmatpush1.msra.mxu0 0.0
      %328 = vmatprep.subr.mxu0 0.0
      %329 = vmatpush1.msra.mxu0 0.0
      %330 = vmatprep.subr.mxu0 %v298
      %331 = vmatpush1.msra.mxu0 %v295
      %332 = vmatprep.subr.mxu0 0.0
      %333 = vmatpush2.msra.mxu0 0.0
      %334 = vmatprep.subr.mxu0 0.0
      %335 = vmatpush2.msra.mxu0 0.0
      %336 = vmatprep.subr.mxu0 0.0
      %337 = vmatpush2.msra.mxu0 0.0
      %338 = vmatprep.subr.mxu0 0.0
      %339 = vmatpush2.msra.mxu0 0.0
      %340 = vmatprep.subr.mxu0 0.0
      %341 = vmatpush2.msra.mxu0 0.0
      %342 = vmatprep.subr.mxu0 0.0
      %343 = vmatpush2.msra.mxu0 0.0
      %344 = vmatprep.subr.mxu0 0.0
      %345 = vmatpush2.msra.mxu0 0.0
      %346 = vmatprep.subr.mxu0 0.0
      %347 = vmatpush2.msra.mxu0 0.0
      %348 = vmatprep.subr.mxu0 0.0
      %349 = vmatpush2.msra.mxu0 0.0
      %350 = vmatprep.subr.mxu0 0.0
      %351 = vmatpush2.msra.mxu0 0.0
      %352 = vmatprep.subr.mxu0 0.0
      %353 = vmatpush2.msra.mxu0 0.0
      %354 = vmatprep.subr.mxu0 0.0
      %355 = vmatpush2.msra.mxu0 0.0
      %356 = vmatprep.subr.mxu0 0.0
      %357 = vmatpush2.msra.mxu0 0.0
      %358 = vmatprep.subr.mxu0 0.0
      %359 = vmatpush2.msra.mxu0 0.0
      %360 = vmatprep.subr.mxu0 0.0
      %361 = vmatpush2.msra.mxu0 0.0
      %362 = vmatprep.subr.mxu0 0.0
      %363 = vmatpush2.msra.mxu0 0.0
      %364 = vmatprep.mubr.f32.mxu0 0.0
      %365 = vmatmul.mubr.f32.gmra.mxu0 %v292
      %v366 = vpop.f32.mrf.mxu0
      %v367 = vadd.f32 %v287, %v366
      %v368 = vpop.f32.mrf.mxu0
      %v369 = vadd.f32 %v289, %v368
      %370 = vdwg.mxu0
      %371 = vrot.lane.b32.xlu0 %v171, 15
      %v372 = vpop.permute.xlu0 %371
      %373 = vrot.lane.b32.xlu0 %v180, 15
      %v374 = vpop.permute.xlu0 %373
      %vm375 = vcmp.lt.s32.totalorder %v173, 15
      %v376 = vsel %vm375, %v372, %v374
      %v377 = vsel %vm375, %v374, %v372
      %vm378 = vcmp.le.s32.totalorder %v177, 14
      %vm379 = vcmp.le.s32.totalorder %v178, 14
      %vm380 = vmand %vm189, %vm378
      %vm381 = vmand %vm190, %vm379
      %v382 = vsel %vm380, %v377, 0.0
      %v383 = vsel %vm381, %v376, 0.0
      %s384 = scalar_lea.vmem %s1, 16
      %v385 = vld [vmem:[%s384] sm:$0xff]
      %v387 = vsel %vm209, %v385, 0
      %v390 = vsel %vm213, %v382, 0
      %v393 = vsel %vm213, %v383, 0
      %395 = vmatprep.subr.mxu0 0.0
      %396 = vmatpush1.msra.mxu0 0.0
      %397 = vmatprep.subr.mxu0 0.0
      %398 = vmatpush1.msra.mxu0 0.0
      %399 = vmatprep.subr.mxu0 0.0
      %400 = vmatpush1.msra.mxu0 0.0
      %401 = vmatprep.subr.mxu0 0.0
      %402 = vmatpush1.msra.mxu0 0.0
      %403 = vmatprep.subr.mxu0 0.0
      %404 = vmatpush1.msra.mxu0 0.0
      %405 = vmatprep.subr.mxu0 0.0
      %406 = vmatpush1.msra.mxu0 0.0
      %407 = vmatprep.subr.mxu0 0.0
      %408 = vmatpush1.msra.mxu0 0.0
      %409 = vmatprep.subr.mxu0 0.0
      %410 = vmatpush1.msra.mxu0 0.0
      %411 = vmatprep.subr.mxu0 0.0
      %412 = vmatpush1.msra.mxu0 0.0
      %413 = vmatprep.subr.mxu0 0.0
      %414 = vmatpush1.msra.mxu0 0.0
      %415 = vmatprep.subr.mxu0 0.0
      %416 = vmatpush1.msra.mxu0 0.0
      %417 = vmatprep.subr.mxu0 0.0
      %418 = vmatpush1.msra.mxu0 0.0
      %419 = vmatprep.subr.mxu0 0.0
      %420 = vmatpush1.msra.mxu0 0.0
      %421 = vmatprep.subr.mxu0 0.0
      %422 = vmatpush1.msra.mxu0 0.0
      %423 = vmatprep.subr.mxu0 0.0
      %424 = vmatpush1.msra.mxu0 0.0
      %425 = vmatprep.subr.mxu0 %v393
      %426 = vmatpush1.msra.mxu0 %v390
      %427 = vmatprep.subr.mxu0 0.0
      %428 = vmatpush2.msra.mxu0 0.0
      %429 = vmatprep.subr.mxu0 0.0
      %430 = vmatpush2.msra.mxu0 0.0
      %431 = vmatprep.subr.mxu0 0.0
      %432 = vmatpush2.msra.mxu0 0.0
      %433 = vmatprep.subr.mxu0 0.0
      %434 = vmatpush2.msra.mxu0 0.0
      %435 = vmatprep.subr.mxu0 0.0
      %436 = vmatpush2.msra.mxu0 0.0
      %437 = vmatprep.subr.mxu0 0.0
      %438 = vmatpush2.msra.mxu0 0.0
      %439 = vmatprep.subr.mxu0 0.0
      %440 = vmatpush2.msra.mxu0 0.0
      %441 = vmatprep.subr.mxu0 0.0
      %442 = vmatpush2.msra.mxu0 0.0
      %443 = vmatprep.subr.mxu0 0.0
      %444 = vmatpush2.msra.mxu0 0.0
      %445 = vmatprep.subr.mxu0 0.0
      %446 = vmatpush2.msra.mxu0 0.0
      %447 = vmatprep.subr.mxu0 0.0
      %448 = vmatpush2.msra.mxu0 0.0
      %449 = vmatprep.subr.mxu0 0.0
      %450 = vmatpush2.msra.mxu0 0.0
      %451 = vmatprep.subr.mxu0 0.0
      %452 = vmatpush2.msra.mxu0 0.0
      %453 = vmatprep.subr.mxu0 0.0
      %454 = vmatpush2.msra.mxu0 0.0
      %455 = vmatprep.subr.mxu0 0.0
      %456 = vmatpush2.msra.mxu0 0.0
      %457 = vmatprep.subr.mxu0 0.0
      %458 = vmatpush2.msra.mxu0 0.0
      %459 = vmatprep.mubr.f32.mxu0 0.0
      %460 = vmatmul.mubr.f32.gmra.mxu0 %v387
      %v461 = vpop.f32.mrf.mxu0
      %v462 = vadd.f32 0.0, %v461
      %v463 = vpop.f32.mrf.mxu0
      %v464 = vadd.f32 0.0, %v463
      %465 = vdwg.mxu0
      %v466 = vadd.f32 %v367, %v462
      %v467 = vadd.f32 %v369, %v464
      %468 = vrot.lane.b32.xlu0 %v171, 1
      %v469 = vpop.permute.xlu0 %468
      %470 = vrot.lane.b32.xlu0 %v180, 1
      %v471 = vpop.permute.xlu0 %470
      %vm472 = vcmp.lt.s32.totalorder %v173, 1
      %v473 = vsel %vm472, %v469, %v471
      %v474 = vsel %vm472, %v471, %v469
      %v475 = vsel %vm191, %v474, 0.0
      %v476 = vsel %vm192, %v473, 0.0
      %s477 = scalar_lea.vmem %s1, 24
      %v478 = vld [vmem:[%s477] sm:$0xff]
      %v480 = vsel %vm209, %v478, 0
      %v483 = vsel %vm213, %v475, 0
      %v486 = vsel %vm213, %v476, 0
      %488 = vmatprep.subr.mxu0 0.0
      %489 = vmatpush1.msra.mxu0 0.0
      %490 = vmatprep.subr.mxu0 0.0
      %491 = vmatpush1.msra.mxu0 0.0
      %492 = vmatprep.subr.mxu0 0.0
      %493 = vmatpush1.msra.mxu0 0.0
      %494 = vmatprep.subr.mxu0 0.0
      %495 = vmatpush1.msra.mxu0 0.0
      %496 = vmatprep.subr.mxu0 0.0
      %497 = vmatpush1.msra.mxu0 0.0
      %498 = vmatprep.subr.mxu0 0.0
      %499 = vmatpush1.msra.mxu0 0.0
      %500 = vmatprep.subr.mxu0 0.0
      %501 = vmatpush1.msra.mxu0 0.0
      %502 = vmatprep.subr.mxu0 0.0
      %503 = vmatpush1.msra.mxu0 0.0
      %504 = vmatprep.subr.mxu0 0.0
      %505 = vmatpush1.msra.mxu0 0.0
      %506 = vmatprep.subr.mxu0 0.0
      %507 = vmatpush1.msra.mxu0 0.0
      %508 = vmatprep.subr.mxu0 0.0
      %509 = vmatpush1.msra.mxu0 0.0
      %510 = vmatprep.subr.mxu0 0.0
      %511 = vmatpush1.msra.mxu0 0.0
      %512 = vmatprep.subr.mxu0 0.0
      %513 = vmatpush1.msra.mxu0 0.0
      %514 = vmatprep.subr.mxu0 0.0
      %515 = vmatpush1.msra.mxu0 0.0
      %516 = vmatprep.subr.mxu0 0.0
      %517 = vmatpush1.msra.mxu0 0.0
      %518 = vmatprep.subr.mxu0 %v486
      %519 = vmatpush1.msra.mxu0 %v483
      %520 = vmatprep.subr.mxu0 0.0
      %521 = vmatpush2.msra.mxu0 0.0
      %522 = vmatprep.subr.mxu0 0.0
      %523 = vmatpush2.msra.mxu0 0.0
      %524 = vmatprep.subr.mxu0 0.0
      %525 = vmatpush2.msra.mxu0 0.0
      %526 = vmatprep.subr.mxu0 0.0
      %527 = vmatpush2.msra.mxu0 0.0
      %528 = vmatprep.subr.mxu0 0.0
      %529 = vmatpush2.msra.mxu0 0.0
      %530 = vmatprep.subr.mxu0 0.0
      %531 = vmatpush2.msra.mxu0 0.0
      %532 = vmatprep.subr.mxu0 0.0
      %533 = vmatpush2.msra.mxu0 0.0
      %534 = vmatprep.subr.mxu0 0.0
      %535 = vmatpush2.msra.mxu0 0.0
      %536 = vmatprep.subr.mxu0 0.0
      %537 = vmatpush2.msra.mxu0 0.0
      %538 = vmatprep.subr.mxu0 0.0
      %539 = vmatpush2.msra.mxu0 0.0
      %540 = vmatprep.subr.mxu0 0.0
      %541 = vmatpush2.msra.mxu0 0.0
      %542 = vmatprep.subr.mxu0 0.0
      %543 = vmatpush2.msra.mxu0 0.0
      %544 = vmatprep.subr.mxu0 0.0
      %545 = vmatpush2.msra.mxu0 0.0
      %546 = vmatprep.subr.mxu0 0.0
      %547 = vmatpush2.msra.mxu0 0.0
      %548 = vmatprep.subr.mxu0 0.0
      %549 = vmatpush2.msra.mxu0 0.0
      %550 = vmatprep.subr.mxu0 0.0
      %551 = vmatpush2.msra.mxu0 0.0
      %552 = vmatprep.mubr.f32.mxu0 0.0
      %553 = vmatmul.mubr.f32.gmra.mxu0 %v480
      %v554 = vpop.f32.mrf.mxu0
      %v555 = vadd.f32 0.0, %v554
      %v556 = vpop.f32.mrf.mxu0
      %v557 = vadd.f32 0.0, %v556
      %558 = vdwg.mxu0
      %v559 = vadd.f32 %v466, %v555
      %v560 = vadd.f32 %v467, %v557
      %s561 = scalar_lea.vmem %s1, 32
      %v562 = vld [vmem:[%s561] sm:$0xff]
      %v564 = vsel %vm209, %v562, 0
      %v566 = vsel %vm213, %v171, 0
      %v568 = vsel %vm213, %v180, 0
      %570 = vmatprep.subr.mxu0 0.0
      %571 = vmatpush1.msra.mxu0 0.0
      %572 = vmatprep.subr.mxu0 0.0
      %573 = vmatpush1.msra.mxu0 0.0
      %574 = vmatprep.subr.mxu0 0.0
      %575 = vmatpush1.msra.mxu0 0.0
      %576 = vmatprep.subr.mxu0 0.0
      %577 = vmatpush1.msra.mxu0 0.0
      %578 = vmatprep.subr.mxu0 0.0
      %579 = vmatpush1.msra.mxu0 0.0
      %580 = vmatprep.subr.mxu0 0.0
      %581 = vmatpush1.msra.mxu0 0.0
      %582 = vmatprep.subr.mxu0 0.0
      %583 = vmatpush1.msra.mxu0 0.0
      %584 = vmatprep.subr.mxu0 0.0
      %585 = vmatpush1.msra.mxu0 0.0
      %586 = vmatprep.subr.mxu0 0.0
      %587 = vmatpush1.msra.mxu0 0.0
      %588 = vmatprep.subr.mxu0 0.0
      %589 = vmatpush1.msra.mxu0 0.0
      %590 = vmatprep.subr.mxu0 0.0
      %591 = vmatpush1.msra.mxu0 0.0
      %592 = vmatprep.subr.mxu0 0.0
      %593 = vmatpush1.msra.mxu0 0.0
      %594 = vmatprep.subr.mxu0 0.0
      %595 = vmatpush1.msra.mxu0 0.0
      %596 = vmatprep.subr.mxu0 0.0
      %597 = vmatpush1.msra.mxu0 0.0
      %598 = vmatprep.subr.mxu0 0.0
      %599 = vmatpush1.msra.mxu0 0.0
      %600 = vmatprep.subr.mxu0 %v568
      %601 = vmatpush1.msra.mxu0 %v566
      %602 = vmatprep.subr.mxu0 0.0
      %603 = vmatpush2.msra.mxu0 0.0
      %604 = vmatprep.subr.mxu0 0.0
      %605 = vmatpush2.msra.mxu0 0.0
      %606 = vmatprep.subr.mxu0 0.0
      %607 = vmatpush2.msra.mxu0 0.0
      %608 = vmatprep.subr.mxu0 0.0
      %609 = vmatpush2.msra.mxu0 0.0
      %610 = vmatprep.subr.mxu0 0.0
      %611 = vmatpush2.msra.mxu0 0.0
      %612 = vmatprep.subr.mxu0 0.0
      %613 = vmatpush2.msra.mxu0 0.0
      %614 = vmatprep.subr.mxu0 0.0
      %615 = vmatpush2.msra.mxu0 0.0
      %616 = vmatprep.subr.mxu0 0.0
      %617 = vmatpush2.msra.mxu0 0.0
      %618 = vmatprep.subr.mxu0 0.0
      %619 = vmatpush2.msra.mxu0 0.0
      %620 = vmatprep.subr.mxu0 0.0
      %621 = vmatpush2.msra.mxu0 0.0
      %622 = vmatprep.subr.mxu0 0.0
      %623 = vmatpush2.msra.mxu0 0.0
      %624 = vmatprep.subr.mxu0 0.0
      %625 = vmatpush2.msra.mxu0 0.0
      %626 = vmatprep.subr.mxu0 0.0
      %627 = vmatpush2.msra.mxu0 0.0
      %628 = vmatprep.subr.mxu0 0.0
      %629 = vmatpush2.msra.mxu0 0.0
      %630 = vmatprep.subr.mxu0 0.0
      %631 = vmatpush2.msra.mxu0 0.0
      %632 = vmatprep.subr.mxu0 0.0
      %633 = vmatpush2.msra.mxu0 0.0
      %634 = vmatprep.mubr.f32.mxu0 0.0
      %635 = vmatmul.mubr.f32.gmra.mxu0 %v564
      %v636 = vpop.f32.mrf.mxu0
      %v637 = vadd.f32 0.0, %v636
      %v638 = vpop.f32.mrf.mxu0
      %v639 = vadd.f32 0.0, %v638
      %640 = vdwg.mxu0
      %v641 = vadd.f32 %v559, %v637
      %v642 = vadd.f32 %v560, %v639
      %643 = vrot.lane.b32.xlu0 %v171, 127
      %v644 = vpop.permute.xlu0 %643
      %645 = vrot.lane.b32.xlu0 %v180, 127
      %v646 = vpop.permute.xlu0 %645
      %vm647 = vcmp.lt.s32.totalorder %v173, 127
      %v648 = vsel %vm647, %v644, %v646
      %v649 = vsel %vm647, %v646, %v644
      %v650 = vsel %vm378, %v648, 0.0
      %v651 = vsel %vm379, %v649, 0.0
      %s652 = scalar_lea.vmem %s1, 40
      %v653 = vld [vmem:[%s652] sm:$0xff]
      %v655 = vsel %vm209, %v653, 0
      %v658 = vsel %vm213, %v650, 0
      %v661 = vsel %vm213, %v651, 0
      %663 = vmatprep.subr.mxu0 0.0
      %664 = vmatpush1.msra.mxu0 0.0
      %665 = vmatprep.subr.mxu0 0.0
      %666 = vmatpush1.msra.mxu0 0.0
      %667 = vmatprep.subr.mxu0 0.0
      %668 = vmatpush1.msra.mxu0 0.0
      %669 = vmatprep.subr.mxu0 0.0
      %670 = vmatpush1.msra.mxu0 0.0
      %671 = vmatprep.subr.mxu0 0.0
      %672 = vmatpush1.msra.mxu0 0.0
      %673 = vmatprep.subr.mxu0 0.0
      %674 = vmatpush1.msra.mxu0 0.0
      %675 = vmatprep.subr.mxu0 0.0
      %676 = vmatpush1.msra.mxu0 0.0
      %677 = vmatprep.subr.mxu0 0.0
      %678 = vmatpush1.msra.mxu0 0.0
      %679 = vmatprep.subr.mxu0 0.0
      %680 = vmatpush1.msra.mxu0 0.0
      %681 = vmatprep.subr.mxu0 0.0
      %682 = vmatpush1.msra.mxu0 0.0
      %683 = vmatprep.subr.mxu0 0.0
      %684 = vmatpush1.msra.mxu0 0.0
      %685 = vmatprep.subr.mxu0 0.0
      %686 = vmatpush1.msra.mxu0 0.0
      %687 = vmatprep.subr.mxu0 0.0
      %688 = vmatpush1.msra.mxu0 0.0
      %689 = vmatprep.subr.mxu0 0.0
      %690 = vmatpush1.msra.mxu0 0.0
      %691 = vmatprep.subr.mxu0 0.0
      %692 = vmatpush1.msra.mxu0 0.0
      %693 = vmatprep.subr.mxu0 %v661
      %694 = vmatpush1.msra.mxu0 %v658
      %695 = vmatprep.subr.mxu0 0.0
      %696 = vmatpush2.msra.mxu0 0.0
      %697 = vmatprep.subr.mxu0 0.0
      %698 = vmatpush2.msra.mxu0 0.0
      %699 = vmatprep.subr.mxu0 0.0
      %700 = vmatpush2.msra.mxu0 0.0
      %701 = vmatprep.subr.mxu0 0.0
      %702 = vmatpush2.msra.mxu0 0.0
      %703 = vmatprep.subr.mxu0 0.0
      %704 = vmatpush2.msra.mxu0 0.0
      %705 = vmatprep.subr.mxu0 0.0
      %706 = vmatpush2.msra.mxu0 0.0
      %707 = vmatprep.subr.mxu0 0.0
      %708 = vmatpush2.msra.mxu0 0.0
      %709 = vmatprep.subr.mxu0 0.0
      %710 = vmatpush2.msra.mxu0 0.0
      %711 = vmatprep.subr.mxu0 0.0
      %712 = vmatpush2.msra.mxu0 0.0
      %713 = vmatprep.subr.mxu0 0.0
      %714 = vmatpush2.msra.mxu0 0.0
      %715 = vmatprep.subr.mxu0 0.0
      %716 = vmatpush2.msra.mxu0 0.0
      %717 = vmatprep.subr.mxu0 0.0
      %718 = vmatpush2.msra.mxu0 0.0
      %719 = vmatprep.subr.mxu0 0.0
      %720 = vmatpush2.msra.mxu0 0.0
      %721 = vmatprep.subr.mxu0 0.0
      %722 = vmatpush2.msra.mxu0 0.0
      %723 = vmatprep.subr.mxu0 0.0
      %724 = vmatpush2.msra.mxu0 0.0
      %725 = vmatprep.subr.mxu0 0.0
      %726 = vmatpush2.msra.mxu0 0.0
      %727 = vmatprep.mubr.f32.mxu0 0.0
      %728 = vmatmul.mubr.f32.gmra.mxu0 %v655
      %v729 = vpop.f32.mrf.mxu0
      %v730 = vadd.f32 0.0, %v729
      %v731 = vpop.f32.mrf.mxu0
      %v732 = vadd.f32 0.0, %v731
      %733 = vdwg.mxu0
      %v734 = vadd.f32 %v641, %v730
      %v735 = vadd.f32 %v642, %v732
      %736 = vrot.lane.b32.xlu0 %v171, 113
      %v737 = vpop.permute.xlu0 %736
      %738 = vrot.lane.b32.xlu0 %v180, 113
      %v739 = vpop.permute.xlu0 %738
      %vm740 = vcmp.lt.s32.totalorder %v173, 113
      %v741 = vsel %vm740, %v737, %v739
      %v742 = vsel %vm740, %v739, %v737
      %vm743 = vcmp.le.s32.totalorder %v175, 14
      %vm744 = vcmp.le.s32.totalorder %v176, 14
      %vm745 = vmand %vm743, %vm191
      %vm746 = vmand %vm744, %vm192
      %v747 = vsel %vm745, %v741, 0.0
      %v748 = vsel %vm746, %v742, 0.0
      %s749 = scalar_lea.vmem %s1, 48
      %v750 = vld [vmem:[%s749] sm:$0xff]
      %v752 = vsel %vm209, %v750, 0
      %v755 = vsel %vm213, %v747, 0
      %v758 = vsel %vm213, %v748, 0
      %760 = vmatprep.subr.mxu0 0.0
      %761 = vmatpush1.msra.mxu0 0.0
      %762 = vmatprep.subr.mxu0 0.0
      %763 = vmatpush1.msra.mxu0 0.0
      %764 = vmatprep.subr.mxu0 0.0
      %765 = vmatpush1.msra.mxu0 0.0
      %766 = vmatprep.subr.mxu0 0.0
      %767 = vmatpush1.msra.mxu0 0.0
      %768 = vmatprep.subr.mxu0 0.0
      %769 = vmatpush1.msra.mxu0 0.0
      %770 = vmatprep.subr.mxu0 0.0
      %771 = vmatpush1.msra.mxu0 0.0
      %772 = vmatprep.subr.mxu0 0.0
      %773 = vmatpush1.msra.mxu0 0.0
      %774 = vmatprep.subr.mxu0 0.0
      %775 = vmatpush1.msra.mxu0 0.0
      %776 = vmatprep.subr.mxu0 0.0
      %777 = vmatpush1.msra.mxu0 0.0
      %778 = vmatprep.subr.mxu0 0.0
      %779 = vmatpush1.msra.mxu0 0.0
      %780 = vmatprep.subr.mxu0 0.0
      %781 = vmatpush1.msra.mxu0 0.0
      %782 = vmatprep.subr.mxu0 0.0
      %783 = vmatpush1.msra.mxu0 0.0
      %784 = vmatprep.subr.mxu0 0.0
      %785 = vmatpush1.msra.mxu0 0.0
      %786 = vmatprep.subr.mxu0 0.0
      %787 = vmatpush1.msra.mxu0 0.0
      %788 = vmatprep.subr.mxu0 0.0
      %789 = vmatpush1.msra.mxu0 0.0
      %790 = vmatprep.subr.mxu0 %v758
      %791 = vmatpush1.msra.mxu0 %v755
      %792 = vmatprep.subr.mxu0 0.0
      %793 = vmatpush2.msra.mxu0 0.0
      %794 = vmatprep.subr.mxu0 0.0
      %795 = vmatpush2.msra.mxu0 0.0
      %796 = vmatprep.subr.mxu0 0.0
      %797 = vmatpush2.msra.mxu0 0.0
      %798 = vmatprep.subr.mxu0 0.0
      %799 = vmatpush2.msra.mxu0 0.0
      %800 = vmatprep.subr.mxu0 0.0
      %801 = vmatpush2.msra.mxu0 0.0
      %802 = vmatprep.subr.mxu0 0.0
      %803 = vmatpush2.msra.mxu0 0.0
      %804 = vmatprep.subr.mxu0 0.0
      %805 = vmatpush2.msra.mxu0 0.0
      %806 = vmatprep.subr.mxu0 0.0
      %807 = vmatpush2.msra.mxu0 0.0
      %808 = vmatprep.subr.mxu0 0.0
      %809 = vmatpush2.msra.mxu0 0.0
      %810 = vmatprep.subr.mxu0 0.0
      %811 = vmatpush2.msra.mxu0 0.0
      %812 = vmatprep.subr.mxu0 0.0
      %813 = vmatpush2.msra.mxu0 0.0
      %814 = vmatprep.subr.mxu0 0.0
      %815 = vmatpush2.msra.mxu0 0.0
      %816 = vmatprep.subr.mxu0 0.0
      %817 = vmatpush2.msra.mxu0 0.0
      %818 = vmatprep.subr.mxu0 0.0
      %819 = vmatpush2.msra.mxu0 0.0
      %820 = vmatprep.subr.mxu0 0.0
      %821 = vmatpush2.msra.mxu0 0.0
      %822 = vmatprep.subr.mxu0 0.0
      %823 = vmatpush2.msra.mxu0 0.0
      %824 = vmatprep.mubr.f32.mxu0 0.0
      %825 = vmatmul.mubr.f32.gmra.mxu0 %v752
      %v826 = vpop.f32.mrf.mxu0
      %v827 = vadd.f32 0.0, %v826
      %v828 = vpop.f32.mrf.mxu0
      %v829 = vadd.f32 0.0, %v828
      %830 = vdwg.mxu0
      %v831 = vadd.f32 %v734, %v827
      %v832 = vadd.f32 %v735, %v829
      %833 = vrot.lane.b32.xlu0 %v171, 112
      %v834 = vpop.permute.xlu0 %833
      %835 = vrot.lane.b32.xlu0 %v180, 112
      %v836 = vpop.permute.xlu0 %835
      %vm837 = vcmp.lt.s32.totalorder %v173, 112
      %v838 = vsel %vm837, %v834, %v836
      %v839 = vsel %vm837, %v836, %v834
      %v840 = vsel %vm743, %v838, 0.0
      %v841 = vsel %vm744, %v839, 0.0
      %s842 = scalar_lea.vmem %s1, 56
      %v843 = vld [vmem:[%s842] sm:$0xff]
      %v845 = vsel %vm209, %v843, 0
      %v848 = vsel %vm213, %v840, 0
      %v851 = vsel %vm213, %v841, 0
      %853 = vmatprep.subr.mxu0 0.0
      %854 = vmatpush1.msra.mxu0 0.0
      %855 = vmatprep.subr.mxu0 0.0
      %856 = vmatpush1.msra.mxu0 0.0
      %857 = vmatprep.subr.mxu0 0.0
      %858 = vmatpush1.msra.mxu0 0.0
      %859 = vmatprep.subr.mxu0 0.0
      %860 = vmatpush1.msra.mxu0 0.0
      %861 = vmatprep.subr.mxu0 0.0
      %862 = vmatpush1.msra.mxu0 0.0
      %863 = vmatprep.subr.mxu0 0.0
      %864 = vmatpush1.msra.mxu0 0.0
      %865 = vmatprep.subr.mxu0 0.0
      %866 = vmatpush1.msra.mxu0 0.0
      %867 = vmatprep.subr.mxu0 0.0
      %868 = vmatpush1.msra.mxu0 0.0
      %869 = vmatprep.subr.mxu0 0.0
      %870 = vmatpush1.msra.mxu0 0.0
      %871 = vmatprep.subr.mxu0 0.0
      %872 = vmatpush1.msra.mxu0 0.0
      %873 = vmatprep.subr.mxu0 0.0
      %874 = vmatpush1.msra.mxu0 0.0
      %875 = vmatprep.subr.mxu0 0.0
      %876 = vmatpush1.msra.mxu0 0.0
      %877 = vmatprep.subr.mxu0 0.0
      %878 = vmatpush1.msra.mxu0 0.0
      %879 = vmatprep.subr.mxu0 0.0
      %880 = vmatpush1.msra.mxu0 0.0
      %881 = vmatprep.subr.mxu0 0.0
      %882 = vmatpush1.msra.mxu0 0.0
      %883 = vmatprep.subr.mxu0 %v851
      %884 = vmatpush1.msra.mxu0 %v848
      %885 = vmatprep.subr.mxu0 0.0
      %886 = vmatpush2.msra.mxu0 0.0
      %887 = vmatprep.subr.mxu0 0.0
      %888 = vmatpush2.msra.mxu0 0.0
      %889 = vmatprep.subr.mxu0 0.0
      %890 = vmatpush2.msra.mxu0 0.0
      %891 = vmatprep.subr.mxu0 0.0
      %892 = vmatpush2.msra.mxu0 0.0
      %893 = vmatprep.subr.mxu0 0.0
      %894 = vmatpush2.msra.mxu0 0.0
      %895 = vmatprep.subr.mxu0 0.0
      %896 = vmatpush2.msra.mxu0 0.0
      %897 = vmatprep.subr.mxu0 0.0
      %898 = vmatpush2.msra.mxu0 0.0
      %899 = vmatprep.subr.mxu0 0.0
      %900 = vmatpush2.msra.mxu0 0.0
      %901 = vmatprep.subr.mxu0 0.0
      %902 = vmatpush2.msra.mxu0 0.0
      %903 = vmatprep.subr.mxu0 0.0
      %904 = vmatpush2.msra.mxu0 0.0
      %905 = vmatprep.subr.mxu0 0.0
      %906 = vmatpush2.msra.mxu0 0.0
      %907 = vmatprep.subr.mxu0 0.0
      %908 = vmatpush2.msra.mxu0 0.0
      %909 = vmatprep.subr.mxu0 0.0
      %910 = vmatpush2.msra.mxu0 0.0
      %911 = vmatprep.subr.mxu0 0.0
      %912 = vmatpush2.msra.mxu0 0.0
      %913 = vmatprep.subr.mxu0 0.0
      %914 = vmatpush2.msra.mxu0 0.0
      %915 = vmatprep.subr.mxu0 0.0
      %916 = vmatpush2.msra.mxu0 0.0
      %917 = vmatprep.mubr.f32.mxu0 0.0
      %918 = vmatmul.mubr.f32.gmra.mxu0 %v845
      %v919 = vpop.f32.mrf.mxu0
      %v920 = vadd.f32 0.0, %v919
      %v921 = vpop.f32.mrf.mxu0
      %v922 = vadd.f32 0.0, %v921
      %923 = vdwg.mxu0
      %v924 = vadd.f32 %v831, %v920
      %v925 = vadd.f32 %v832, %v922
      %926 = vrot.lane.b32.xlu0 %v171, 111
      %v927 = vpop.permute.xlu0 %926
      %928 = vrot.lane.b32.xlu0 %v180, 111
      %v929 = vpop.permute.xlu0 %928
      %vm930 = vcmp.lt.s32.totalorder %v173, 111
      %v931 = vsel %vm930, %v927, %v929
      %v932 = vsel %vm930, %v929, %v927
      %vm933 = vmand %vm743, %vm378
      %vm934 = vmand %vm744, %vm379
      %v935 = vsel %vm933, %v931, 0.0
      %v936 = vsel %vm934, %v932, 0.0
      %s937 = scalar_lea.vmem %s1, 64
      %v938 = vld [vmem:[%s937] sm:$0xff]
      %v940 = vsel %vm209, %v938, 0
      %v943 = vsel %vm213, %v935, 0
      %v946 = vsel %vm213, %v936, 0
      %948 = vmatprep.subr.mxu0 0.0
      %949 = vmatpush1.msra.mxu0 0.0
      %950 = vmatprep.subr.mxu0 0.0
      %951 = vmatpush1.msra.mxu0 0.0
      %952 = vmatprep.subr.mxu0 0.0
      %953 = vmatpush1.msra.mxu0 0.0
      %954 = vmatprep.subr.mxu0 0.0
      %955 = vmatpush1.msra.mxu0 0.0
      %956 = vmatprep.subr.mxu0 0.0
      %957 = vmatpush1.msra.mxu0 0.0
      %958 = vmatprep.subr.mxu0 0.0
      %959 = vmatpush1.msra.mxu0 0.0
      %960 = vmatprep.subr.mxu0 0.0
      %961 = vmatpush1.msra.mxu0 0.0
      %962 = vmatprep.subr.mxu0 0.0
      %963 = vmatpush1.msra.mxu0 0.0
      %964 = vmatprep.subr.mxu0 0.0
      %965 = vmatpush1.msra.mxu0 0.0
      %966 = vmatprep.subr.mxu0 0.0
      %967 = vmatpush1.msra.mxu0 0.0
      %968 = vmatprep.subr.mxu0 0.0
      %969 = vmatpush1.msra.mxu0 0.0
      %970 = vmatprep.subr.mxu0 0.0
      %971 = vmatpush1.msra.mxu0 0.0
      %972 = vmatprep.subr.mxu0 0.0
      %973 = vmatpush1.msra.mxu0 0.0
      %974 = vmatprep.subr.mxu0 0.0
      %975 = vmatpush1.msra.mxu0 0.0
      %976 = vmatprep.subr.mxu0 0.0
      %977 = vmatpush1.msra.mxu0 0.0
      %978 = vmatprep.subr.mxu0 %v946
      %979 = vmatpush1.msra.mxu0 %v943
      %980 = vmatprep.subr.mxu0 0.0
      %981 = vmatpush2.msra.mxu0 0.0
      %982 = vmatprep.subr.mxu0 0.0
      %983 = vmatpush2.msra.mxu0 0.0
      %984 = vmatprep.subr.mxu0 0.0
      %985 = vmatpush2.msra.mxu0 0.0
      %986 = vmatprep.subr.mxu0 0.0
      %987 = vmatpush2.msra.mxu0 0.0
      %988 = vmatprep.subr.mxu0 0.0
      %989 = vmatpush2.msra.mxu0 0.0
      %990 = vmatprep.subr.mxu0 0.0
      %991 = vmatpush2.msra.mxu0 0.0
      %992 = vmatprep.subr.mxu0 0.0
      %993 = vmatpush2.msra.mxu0 0.0
      %994 = vmatprep.subr.mxu0 0.0
      %995 = vmatpush2.msra.mxu0 0.0
      %996 = vmatprep.subr.mxu0 0.0
      %997 = vmatpush2.msra.mxu0 0.0
      %998 = vmatprep.subr.mxu0 0.0
      %999 = vmatpush2.msra.mxu0 0.0
      %1000 = vmatprep.subr.mxu0 0.0
      %1001 = vmatpush2.msra.mxu0 0.0
      %1002 = vmatprep.subr.mxu0 0.0
      %1003 = vmatpush2.msra.mxu0 0.0
      %1004 = vmatprep.subr.mxu0 0.0
      %1005 = vmatpush2.msra.mxu0 0.0
      %1006 = vmatprep.subr.mxu0 0.0
      %1007 = vmatpush2.msra.mxu0 0.0
      %1008 = vmatprep.subr.mxu0 0.0
      %1009 = vmatpush2.msra.mxu0 0.0
      %1010 = vmatprep.subr.mxu0 0.0
      %1011 = vmatpush2.msra.mxu0 0.0
      %1012 = vmatprep.mubr.f32.mxu0 0.0
      %1013 = vmatmul.mubr.f32.gmra.mxu0 %v940
      %v1014 = vpop.f32.mrf.mxu0
      %v1015 = vadd.f32 0.0, %v1014
      %v1016 = vpop.f32.mrf.mxu0
      %v1017 = vadd.f32 0.0, %v1016
      %1018 = vdwg.mxu0
      %v1019 = vadd.f32 %v924, %v1015
      %v1020 = vadd.f32 %v925, %v1017
      %v1021 = vld [vmem:[%s2] sm:$0xff]
      %1023 = vset.pattern.permute.xlu0 0
      %1024 = vperm.xlu0 %1023, %v1021
      %v1025 = vpop.permute.xlu0 %1024
      %v1027 = vadd.f32 %v1019, %v1025
      %v1028 = vadd.f32 %v1020, %v1025
      %v1029 = vmax.f32 %v1027, 0.0
      %v1030 = vmax.f32 %v1028, 0.0
      %1031 = vst [vmem:[%s170] sm:$0xff] %v1029
      %1032 = vst [vmem:[%s170 + $0x8] sm:$0xff] %v1030
      %p1033 = scmp.lt.s32.totalorder %s14, 1
      %s1034 = scalar_select %p1033, %s14, 1
      %s1035 = smul.addr %s1034, 2
      %s1036 = smul.addr %s1035, 8
      %s1037 = scalar_lea.vmem %s3, %s1036
      // Predicated region
      $region33: #{conv_layer_forward.1} parent=31 // pred_check
        %p1038 = pneg %p100
      $region34: #{conv_layer_forward.1} parent=31 // pred_check_branch
        %1040 = sbr.rel (%p1038) target = $region36
      $region35: #{conv_layer_forward.1} parent=31 // pred_region
        _
      $region36: #{conv_layer_forward.1} parent=31 // pred_fallthru
        _
    $region32: #{conv_layer_forward.1} parent=5 // pred_fallthru
      _
    %p1041 = scmp.le.s32.totalorder 2, %s9
    // Predicated region
    $region37: #{conv_layer_forward.1} parent=5 // pred_check
      %p1042 = pneg %p1041
    $region38: #{conv_layer_forward.1} parent=5 // pred_check_branch
      %1044 = sbr.rel (%p1042) target = $region40
    $region39: #{conv_layer_forward.1} parent=5 // pred_region
      %s1045 = ssub.s32 %s9, 2
      // Predicated region
      $region41: #{conv_layer_forward.1} parent=39 // pred_check
        %p1046 = pneg %p106
      $region42: #{conv_layer_forward.1} parent=39 // pred_check_branch
        %1048 = sbr.rel (%p1046) target = $region44
      $region43: #{conv_layer_forward.1} parent=39 // pred_region
        %p1049 = scmp.lt.s32.totalorder %s15, 1
        %s1050 = scalar_select %p1049, %s15, 1
        %s1051 = smul.addr %s1050, 2
        %s1052 = smul.addr %s1051, 8
        %s1053 = scalar_lea.vmem %s3, %s1052
      $region44: #{conv_layer_forward.1} parent=39 // pred_fallthru
        _
    $region40: #{conv_layer_forward.1} parent=5 // pred_fallthru
      _
  $region6: #{conv_layer_forward.1} parent=0 // loop_footer
    %s13 = sadd.s32 1, %s9
  $region7: #{conv_layer_forward.1} parent=0 // loop_footer_branch
    %8 = sbr.rel target = $region3
  $region8: #{conv_layer_forward.1} parent=0 // loop_exit
    _

</llo_original>
